<compile_context>
chip_gen: v7x
topology: tpu7x:2x2x1
jax: 0.10.0
libtpu: 0.0.40
codegen_flags: <defaults>
</compile_context>

<pallas_src>
import functools

import jax
import jax.numpy as jnp
from jax.experimental import pallas as pl
from jax.experimental.pallas import tpu as pltpu


def _se_kernel(*refs, rescale_input: bool, inv_hw: float, excite_dtype, block_batch: int):
    # refs (rescale_input=True):  x_ref (BT,C,HW), inv_ref (B,1) resident, w1 (C,hid), w2 (hid,C), o_ref
    # refs (rescale_input=False): x_ref (BT,C,HW),                          w1 (C,hid), w2 (hid,C), o_ref
    if rescale_input:
        x_ref, inv_ref, w1_ref, w2_ref, o_ref = refs
    else:
        x_ref, w1_ref, w2_ref, o_ref = refs
        inv_ref = None

    # Squeeze: f32 reduction over the spatial (lane) axis.  (BT, C, HW) -> (BT, C)
    y = jnp.sum(x_ref[...].astype(jnp.float32), axis=-1)
    if rescale_input:
        start = pl.program_id(0) * block_batch
        inv = inv_ref[pl.ds(start, block_batch), :]          # (BT, 1) precomputed 1/sum(mask)
        y = y * inv
    else:
        y = y * jnp.float32(inv_hw)                          # plain mean over H*W

    # Tiny FC stack, batched across the BT rows, f32 accumulation on the MXU.
    h = jnp.maximum(jnp.dot(y, w1_ref[...], preferred_element_type=jnp.float32), 0.0)
    s = jax.nn.sigmoid(jnp.dot(h, w2_ref[...], preferred_element_type=jnp.float32))  # (BT, C)

    # Excite: re-read x from VMEM (no live f32 block copy across the dots).
    scale = s.astype(excite_dtype)[:, :, None]               # (BT, C, 1)
    o_ref[...] = (x_ref[...].astype(excite_dtype) * scale).astype(o_ref.dtype)


def _device_info():
    """Generation-specific tiling knobs: (#TensorCores, VMEM budget, scoped VMEM limit)."""
    kind = ""
    try:
        kind = jax.devices()[0].device_kind.lower()
    except Exception:
        pass
    if "v7" in kind:
        # 64 MiB physical VMEM, 2 TensorCores per chip.
        return {"kind": kind, "num_cores": 2, "vmem_budget": 40 << 20, "vmem_limit": 56 << 20}
    if "v6" in kind or "v5" in kind:
        # 128 MiB physical VMEM, single TensorCore.
        return {"kind": kind, "num_cores": 1, "vmem_budget": 72 << 20, "vmem_limit": 100 << 20}
    # Unknown / older part: stay conservative, keep the default scoped VMEM limit.
    return {"kind": kind, "num_cores": 1, "vmem_budget": 12 << 20, "vmem_limit": None}


def _largest_divisor_leq(n: int, cap: int) -> int:
    cap = max(1, min(cap, n))
    for d in range(cap, 0, -1):
        if n % d == 0:
            return d
    return 1


def _choose_block_batch(B, C, HW, in_itemsize, excite_itemsize, hidden, num_cores, vmem_budget):
    """Largest divisor of B whose (BT, C, HW) in+out double-buffered blocks fit the budget.
    On 2-TC parts keep >= 2 grid steps so both cores get work."""
    row_io = C * HW * in_itemsize
    per_bt = 4 * row_io                                   # x block + out block, double-buffered
    if excite_itemsize > in_itemsize:                     # live f32 upcast of the block at the excite
        per_bt += C * HW * excite_itemsize
    resident = 2 * 2 * C * hidden * 4                     # w1 + w2, 2 buffers each
    resident += 2 * ((B + 7) // 8) * 8 * 128 * 4          # resident (B,1) reciprocal block
    resident += 2 << 20                                   # misc headroom
    avail = max(per_bt, vmem_budget - resident)
    bt_cap = max(1, avail // per_bt)
    bt_cap = min(bt_cap, B)
    if num_cores >= 2 and B >= 2:
        bt_cap = min(bt_cap, max(1, B // num_cores))      # keep >= num_cores grid steps
    return _largest_divisor_leq(B, bt_cap)


def se_layer(x, input_mask, w1, w2, *, rescale_input: bool, block_batch: int | None = None):
    """x: (B, C, H, W), input_mask: (B, 1, H, W).
    w1: (C, C//r), w2: (C//r, C)  -- 'in x out' layout (transpose of nn.Linear.weight)."""
    B, C, H, W = x.shape
    HW = H * W
    hidden = w1.shape[1]

    info = _device_info()

    # Excite multiply dtype: bf16 stays bf16 on v6e/v7x (bf16 VALU); f32 path on v5e & f32 inputs.
    in_itemsize = x.dtype.itemsize
    if x.dtype == jnp.bfloat16 and "v5" not in info["kind"]:
        excite_dtype, excite_itemsize = jnp.bfloat16, 2
    else:
        excite_dtype, excite_itemsize = jnp.float32, 4

    if block_batch is None:
        BT = _choose_block_batch(B, C, HW, in_itemsize, excite_itemsize, hidden,
                                 info["num_cores"], info["vmem_budget"])
    else:
        BT = int(block_batch)
    if B % BT != 0:
        raise ValueError(f"block_batch={BT} must divide batch size B={B}")

    # Metadata-only reshape: no padding, no extra HBM pass.
    x_flat = x.reshape(B, C, HW)
    grid = (B // BT,)

    x_spec = pl.BlockSpec((BT, C, HW), lambda b: (b, 0, 0))
    o_spec = pl.BlockSpec((BT, C, HW), lambda b: (b, 0, 0))
    w1_spec = pl.BlockSpec((C, hidden), lambda b: (0, 0))     # resident across grid steps
    w2_spec = pl.BlockSpec((hidden, C), lambda b: (0, 0))

    operands = [x_flat]
    in_specs = [x_spec]
    if rescale_input:
        # Tiny (B, 1) reciprocal of per-row valid-pixel counts, resident in VMEM.
        msum = jnp.sum(input_mask.reshape(B, HW).astype(jnp.float32), axis=-1, keepdims=True)
        inv_msum = 1.0 / msum
        operands.append(inv_msum)
        in_specs.append(pl.BlockSpec((B, 1), lambda b: (0, 0)))
    operands += [w1, w2]
    in_specs += [w1_spec, w2_spec]

    kernel = functools.partial(
        _se_kernel,
        rescale_input=rescale_input,
        inv_hw=1.0 / float(HW),
        excite_dtype=excite_dtype,
        block_batch=BT,
    )

    w_bytes = (w1.size + w2.size) * w1.dtype.itemsize
    cost = pl.CostEstimate(
        flops=2 * B * C * HW + 4 * B * C * hidden,
        transcendentals=B * C,
        bytes_accessed=2 * B * C * HW * in_itemsize + w_bytes + (B * 4 if rescale_input else 0),
    )

    out_flat = pl.pallas_call(
        kernel,
        out_shape=jax.ShapeDtypeStruct((B, C, HW), x.dtype),
        grid=grid,
        in_specs=in_specs,
        out_specs=o_spec,
        compiler_params=pltpu.CompilerParams(
            dimension_semantics=("parallel",),
            vmem_limit_bytes=info["vmem_limit"],
        ),
        cost_estimate=cost,
    )(*operands)

    return out_flat.reshape(B, C, H, W)


def se_layer_ref(x, input_mask, w1, w2, *, rescale_input: bool):
    """Pure-JAX reference mirroring the PyTorch forward."""
    B, C, H, W = x.shape
    if rescale_input:
        y = x.reshape(B, C, -1).sum(-1) / input_mask.reshape(B, 1, -1).sum(-1)
    else:
        y = x.reshape(B, C, -1).mean(-1)
    h = jnp.maximum(y @ w1, 0.0)
    s = jax.nn.sigmoid(h @ w2)
    return x * s[:, :, None, None]


def _run_case(key, B, C, H, W, reduction, rescale_input, block_batch=None):
    hidden = max(1, C // reduction)
    k_x, k_m, k_w1, k_w2 = jax.random.split(key, 4)
    x = jax.random.normal(k_x, (B, C, H, W), dtype=jnp.float32)
    input_mask = (jax.random.uniform(k_m, (B, 1, H, W)) > 0.3).astype(jnp.float32)
    w1 = jax.random.normal(k_w1, (C, hidden), dtype=jnp.float32) / jnp.sqrt(jnp.float32(C))
    w2 = jax.random.normal(k_w2, (hidden, C), dtype=jnp.float32) / jnp.sqrt(jnp.float32(hidden))

    out = jax.block_until_ready(
        se_layer(x, input_mask, w1, w2, rescale_input=rescale_input, block_batch=block_batch))
    ref = se_layer_ref(x, input_mask, w1, w2, rescale_input=rescale_input)
    assert out.shape == (B, C, H, W)
    assert jnp.allclose(out, ref, rtol=1e-5, atol=1e-5), (
        f"mismatch vs reference (B={B}, C={C}, H={H}, W={W}, rescale={rescale_input})")


if __name__ == "__main__":
    key = jax.random.PRNGKey(0)
    keys = jax.random.split(key, 6)
    # Main config: n_channels=64, reduction=16 -> hidden=4, 16x16 board.
    _run_case(keys[0], B=2, C=64, H=16, W=16, reduction=16, rescale_input=True)
    _run_case(keys[1], B=2, C=64, H=16, W=16, reduction=16, rescale_input=False)
    # Ragged spatial dim (15*15=225, full-dim block + masked tail stores) and odd batch (B=3).
    _run_case(keys[2], B=3, C=32, H=15, W=15, reduction=16, rescale_input=True)
    _run_case(keys[3], B=3, C=32, H=15, W=15, reduction=16, rescale_input=False)
    # Force a multi-step grid (exercises the dynamic pl.ds slice of the resident reciprocals).
    _run_case(keys[4], B=4, C=64, H=16, W=16, reduction=16, rescale_input=True, block_batch=2)
    _run_case(keys[5], B=4, C=64, H=16, W=16, reduction=16, rescale_input=False, block_batch=2)
    print("KERNEL_OK")
</pallas_src>

<mosaic_0001>
module attributes {stable_mosaic.version = 11 : i64} {
  func.func @_se_kernel(%arg0: i32, %arg1: memref<2x64x256xf32, #tpu.memory_space<vmem>>, %arg2: memref<2x1xf32, #tpu.memory_space<vmem>>, %arg3: memref<64x4xf32, #tpu.memory_space<vmem>>, %arg4: memref<4x64xf32, #tpu.memory_space<vmem>>, %arg5: memref<2x64x256xf32, #tpu.memory_space<vmem>>) attributes {dimension_semantics = [#tpu.dimension_semantics<parallel>], iteration_bounds = array<i64: 1>, scalar_prefetch = 0 : i64, scratch_operands = 0 : i64, tpu.core_type = #tpu.core_type<tc>, window_params = [{transform_indices = @transform_0, window_bounds = array<i64: 2, 64, 256>}, {pipeline_mode = #tpu.pipeline_mode<synchronous>, transform_indices = @transform_1, window_bounds = array<i64: 2, 1>}, {pipeline_mode = #tpu.pipeline_mode<synchronous>, transform_indices = @transform_2, window_bounds = array<i64: 64, 4>}, {pipeline_mode = #tpu.pipeline_mode<synchronous>, transform_indices = @transform_3, window_bounds = array<i64: 4, 64>}, {transform_indices = @transform_4, window_bounds = array<i64: 2, 64, 256>}]} {
    %c0 = arith.constant 0 : index
    %c0_0 = arith.constant 0 : index
    %c0_1 = arith.constant 0 : index
    %0 = vector.load %arg1[%c0, %c0_0, %c0_1] : memref<2x64x256xf32, #tpu.memory_space<vmem>>, vector<2x64x256xf32>
    %cst = arith.constant dense<0.000000e+00> : vector<2x64xf32>
    %1 = vector.multi_reduction <add>, %0, %cst [2] : vector<2x64x256xf32> to vector<2x64xf32>
    %c2_i32 = arith.constant 2 : i32
    %2 = arith.muli %arg0, %c2_i32 : i32
    %3 = arith.index_cast %2 : i32 to index
    %c0_2 = arith.constant 0 : index
    %4 = vector.load %arg2[%3, %c0_2] : memref<2x1xf32, #tpu.memory_space<vmem>>, vector<2x1xf32>
    %5 = vector.broadcast %4 : vector<2x1xf32> to vector<2x64xf32>
    %6 = arith.mulf %1, %5 : vector<2x64xf32>
    %c0_3 = arith.constant 0 : index
    %c0_4 = arith.constant 0 : index
    %7 = vector.load %arg3[%c0_3, %c0_4] : memref<64x4xf32, #tpu.memory_space<vmem>>, vector<64x4xf32>
    %cst_5 = arith.constant dense<0.000000e+00> : vector<2x4xf32>
    %8 = tpu.matmul %6, %7, %cst_5 {dimension_numbers = #tpu.dot_dimension_numbers<[1], [0], [0], [1], [0, 0, 1, 1], [], []>} : vector<2x64xf32>, vector<64x4xf32>, vector<2x4xf32> -> vector<2x4xf32>
    %cst_6 = arith.constant 0.000000e+00 : f32
    %9 = vector.broadcast %cst_6 : f32 to vector<2x4xf32>
    %10 = arith.maximumf %8, %9 : vector<2x4xf32>
    %c0_7 = arith.constant 0 : index
    %c0_8 = arith.constant 0 : index
    %11 = vector.load %arg4[%c0_7, %c0_8] : memref<4x64xf32, #tpu.memory_space<vmem>>, vector<4x64xf32>
    %cst_9 = arith.constant dense<0.000000e+00> : vector<2x64xf32>
    %12 = tpu.matmul %10, %11, %cst_9 {dimension_numbers = #tpu.dot_dimension_numbers<[1], [0], [0], [1], [0, 0, 1, 1], [], []>} : vector<2x4xf32>, vector<4x64xf32>, vector<2x64xf32> -> vector<2x64xf32>
    %13 = arith.negf %12 : vector<2x64xf32>
    %14 = math.exp %13 : vector<2x64xf32>
    %cst_10 = arith.constant 1.000000e+00 : f32
    %15 = vector.broadcast %cst_10 : f32 to vector<2x64xf32>
    %16 = arith.addf %15, %14 : vector<2x64xf32>
    %17 = arith.divf %15, %16 : vector<2x64xf32>
    %18 = vector.shape_cast %17 : vector<2x64xf32> to vector<2x64x1xf32>
    %c0_11 = arith.constant 0 : index
    %c0_12 = arith.constant 0 : index
    %c0_13 = arith.constant 0 : index
    %19 = vector.load %arg1[%c0_11, %c0_12, %c0_13] : memref<2x64x256xf32, #tpu.memory_space<vmem>>, vector<2x64x256xf32>
    %20 = vector.broadcast %18 : vector<2x64x1xf32> to vector<2x64x256xf32>
    %21 = arith.mulf %19, %20 : vector<2x64x256xf32>
    %c0_14 = arith.constant 0 : index
    %c0_15 = arith.constant 0 : index
    %c0_16 = arith.constant 0 : index
    %22 = vector.load %arg5[%c0_14, %c0_15, %c0_16] : memref<2x64x256xf32, #tpu.memory_space<vmem>>, vector<2x64x256xf32>
    tpu.vector_store %arg5[%c0_14, %c0_15, %c0_16], %21 {strides = array<i32>} : memref<2x64x256xf32, #tpu.memory_space<vmem>>, vector<2x64x256xf32>,
    return
  }
  func.func @transform_0(%arg0: i32) -> (i32, i32, i32) {
    %c0_i32 = arith.constant 0 : i32
    %c0_i32_0 = arith.constant 0 : i32
    %c0_i32_1 = arith.constant 0 : i32
    return %arg0, %c0_i32, %c0_i32_0 : i32, i32, i32
  }
  func.func @transform_1(%arg0: i32) -> (i32, i32) {
    %c0_i32 = arith.constant 0 : i32
    %c0_i32_0 = arith.constant 0 : i32
    %c0_i32_1 = arith.constant 0 : i32
    return %c0_i32, %c0_i32_0 : i32, i32
  }
  func.func @transform_2(%arg0: i32) -> (i32, i32) {
    %c0_i32 = arith.constant 0 : i32
    %c0_i32_0 = arith.constant 0 : i32
    %c0_i32_1 = arith.constant 0 : i32
    return %c0_i32, %c0_i32_0 : i32, i32
  }
  func.func @transform_3(%arg0: i32) -> (i32, i32) {
    %c0_i32 = arith.constant 0 : i32
    %c0_i32_0 = arith.constant 0 : i32
    %c0_i32_1 = arith.constant 0 : i32
    return %c0_i32, %c0_i32_0 : i32, i32
  }
  func.func @transform_4(%arg0: i32) -> (i32, i32, i32) {
    %c0_i32 = arith.constant 0 : i32
    %c0_i32_0 = arith.constant 0 : i32
    %c0_i32_1 = arith.constant 0 : i32
    return %arg0, %c0_i32, %c0_i32_0 : i32, i32, i32
  }
}

</mosaic_0001>

<llo_original>
// kernel: tpu_custom_call.1
$region0: #{tpu_custom_call.1}
  #allocation0 [shape = 'u32[]', space=smem, size = 0x4, offset = 0x4, fixed_abs, tag = 'smem constant byte address 0x4 - core index']
  #allocation1 [shape = 'u32[144,128]{1,0:T(1,128)}', space=vmem, size = 0x12000, scoped, tag = 'internal scratch']
  %s0 = inlined_call_operand.hbm [shape: f32[2,64,256], index: 0, kind: input, shape index: {}]
  %s1 = inlined_call_operand.vmem [shape: f32[2,1], index: 1, kind: input, shape index: {}]
  %s2 = inlined_call_operand.vmem [shape: f32[64,4], index: 2, kind: input, shape index: {}]
  %s3 = inlined_call_operand.vmem [shape: f32[4,64], index: 3, kind: input, shape index: {}]
  %s4 = inlined_call_operand.hbm [shape: f32[2,64,256], index: 4, kind: output, shape index: {}]
  %s5 = sld [smem:[#allocation0]]
  $region30: #{tpu_custom_call.1} parent=0
    _
  %s7 = ssub.s32 1, %s5
  %s8 = scalar_select 0, %s7, %s5
  $region1: #{tpu_custom_call.1} parent=0
    #allocation2 [shape = 'u8[131072]{0}', space=vmem, size = 0x20000, scoped, tag = 'input window, operand 0, single buffered']
    #allocation3 [shape = 's32[1]{0}', space=sflag, size = 0x4, scoped, tag = 'scoped memory for tpu_custom_call.1']
    #allocation4 [shape = 's32[1]{0}', space=sflag, size = 0x4, scoped, tag = 'scoped memory for tpu_custom_call.1']
    #allocation5 [shape = 'u8[131072]{0}', space=vmem, size = 0x20000, scoped, tag = 'output window, operand 0, single buffered']
    %9 = vsyncpa [#allocation3], 0
    %10 = vsyncpa [#allocation4], 0
    // Predicated region
    $region2: #{tpu_custom_call.1} parent=1 // pred_check
      _
    $region3: #{tpu_custom_call.1} parent=1 // pred_check_branch
      %12 = sbr.rel (0) target = $region5
    $region4: #{tpu_custom_call.1} parent=1 // pred_region
      %s14 = ssub.s32 4096, 4096
      %15 = vsyncadd [#allocation3], %s14
      %s16 = sshll.u32 [#allocation2], 4
      %s17 = int_to_ptr.vmem [resolvable:$true] %s16
      %22 = dma.hbm_to_vmem [thread:$0]  %s0, 4096, %s17, [#allocation3], 256, 256, 16
    $region5: #{tpu_custom_call.1} parent=1 // pred_fallthru
      _
    // Predicated region
    $region6: #{tpu_custom_call.1} parent=1 // pred_check
      _
    $region7: #{tpu_custom_call.1} parent=1 // pred_check_branch
      %24 = sbr.rel (0) target = $region9
    $region8: #{tpu_custom_call.1} parent=1 // pred_region
      _
    $region9: #{tpu_custom_call.1} parent=1 // pred_fallthru
      _
    // Predicated region
    $region10: #{tpu_custom_call.1} parent=1 // pred_check
      _
    $region11: #{tpu_custom_call.1} parent=1 // pred_check_branch
      %26 = sbr.rel (0) target = $region13
    $region12: #{tpu_custom_call.1} parent=1 // pred_region
      _
    $region13: #{tpu_custom_call.1} parent=1 // pred_fallthru
      _
    // Predicated region
    $region14: #{tpu_custom_call.1} parent=1 // pred_check
      _
    $region15: #{tpu_custom_call.1} parent=1 // pred_check_branch
      %28 = sbr.rel (0) target = $region17
    $region16: #{tpu_custom_call.1} parent=1 // pred_region
      _
    $region17: #{tpu_custom_call.1} parent=1 // pred_fallthru
      _
    // Predicated region
    $region18: #{tpu_custom_call.1} parent=1 // pred_check
      _
    $region19: #{tpu_custom_call.1} parent=1 // pred_check_branch
      %30 = sbr.rel (0) target = $region21
    $region20: #{tpu_custom_call.1} parent=1 // pred_region
      %31 = dma.done [#allocation3], 4096
    $region21: #{tpu_custom_call.1} parent=1 // pred_fallthru
      _
    %v32 = vld [vmem:[#allocation2] sm:$0xff]
    %v33 = vld [vmem:[#allocation2 + $0x8] sm:$0xff]
    %v34 = vld [vmem:[#allocation2 + $0x10] sm:$0xff]
    %v35 = vld [vmem:[#allocation2 + $0x18] sm:$0xff]
    %v36 = vld [vmem:[#allocation2 + $0x20] sm:$0xff]
    %v37 = vld [vmem:[#allocation2 + $0x28] sm:$0xff]
    %v38 = vld [vmem:[#allocation2 + $0x30] sm:$0xff]
    %v39 = vld [vmem:[#allocation2 + $0x38] sm:$0xff]
    %v40 = vld [vmem:[#allocation2 + $0x40] sm:$0xff]
    %v41 = vld [vmem:[#allocation2 + $0x48] sm:$0xff]
    %v42 = vld [vmem:[#allocation2 + $0x50] sm:$0xff]
    %v43 = vld [vmem:[#allocation2 + $0x58] sm:$0xff]
    %v44 = vld [vmem:[#allocation2 + $0x60] sm:$0xff]
    %v45 = vld [vmem:[#allocation2 + $0x68] sm:$0xff]
    %v46 = vld [vmem:[#allocation2 + $0x70] sm:$0xff]
    %v47 = vld [vmem:[#allocation2 + $0x78] sm:$0xff]
    %v48 = vld [vmem:[#allocation2 + $0x80] sm:$0xff]
    %v49 = vld [vmem:[#allocation2 + $0x88] sm:$0xff]
    %v50 = vld [vmem:[#allocation2 + $0x90] sm:$0xff]
    %v51 = vld [vmem:[#allocation2 + $0x98] sm:$0xff]
    %v52 = vld [vmem:[#allocation2 + $0xa0] sm:$0xff]
    %v53 = vld [vmem:[#allocation2 + $0xa8] sm:$0xff]
    %v54 = vld [vmem:[#allocation2 + $0xb0] sm:$0xff]
    %v55 = vld [vmem:[#allocation2 + $0xb8] sm:$0xff]
    %v56 = vld [vmem:[#allocation2 + $0xc0] sm:$0xff]
    %v57 = vld [vmem:[#allocation2 + $0xc8] sm:$0xff]
    %v58 = vld [vmem:[#allocation2 + $0xd0] sm:$0xff]
    %v59 = vld [vmem:[#allocation2 + $0xd8] sm:$0xff]
    %v60 = vld [vmem:[#allocation2 + $0xe0] sm:$0xff]
    %v61 = vld [vmem:[#allocation2 + $0xe8] sm:$0xff]
    %v62 = vld [vmem:[#allocation2 + $0xf0] sm:$0xff]
    %v63 = vld [vmem:[#allocation2 + $0xf8] sm:$0xff]
    %v64 = vadd.f32 %v32, %v33
    %65 = vadd.xlane.f32.xlu0 %v64
    %v66 = vpop.xlane.xlu0 %65
    %v67 = vadd.f32 %v34, %v35
    %68 = vadd.xlane.f32.xlu0 %v67
    %v69 = vpop.xlane.xlu0 %68
    %v70 = vadd.f32 %v36, %v37
    %71 = vadd.xlane.f32.xlu0 %v70
    %v72 = vpop.xlane.xlu0 %71
    %v73 = vadd.f32 %v38, %v39
    %74 = vadd.xlane.f32.xlu0 %v73
    %v75 = vpop.xlane.xlu0 %74
    %v76 = vadd.f32 %v40, %v41
    %77 = vadd.xlane.f32.xlu0 %v76
    %v78 = vpop.xlane.xlu0 %77
    %v79 = vadd.f32 %v42, %v43
    %80 = vadd.xlane.f32.xlu0 %v79
    %v81 = vpop.xlane.xlu0 %80
    %v82 = vadd.f32 %v44, %v45
    %83 = vadd.xlane.f32.xlu0 %v82
    %v84 = vpop.xlane.xlu0 %83
    %v85 = vadd.f32 %v46, %v47
    %86 = vadd.xlane.f32.xlu0 %v85
    %v87 = vpop.xlane.xlu0 %86
    %v88 = vadd.f32 %v48, %v49
    %89 = vadd.xlane.f32.xlu0 %v88
    %v90 = vpop.xlane.xlu0 %89
    %v91 = vadd.f32 %v50, %v51
    %92 = vadd.xlane.f32.xlu0 %v91
    %v93 = vpop.xlane.xlu0 %92
    %v94 = vadd.f32 %v52, %v53
    %95 = vadd.xlane.f32.xlu0 %v94
    %v96 = vpop.xlane.xlu0 %95
    %v97 = vadd.f32 %v54, %v55
    %98 = vadd.xlane.f32.xlu0 %v97
    %v99 = vpop.xlane.xlu0 %98
    %v100 = vadd.f32 %v56, %v57
    %101 = vadd.xlane.f32.xlu0 %v100
    %v102 = vpop.xlane.xlu0 %101
    %v103 = vadd.f32 %v58, %v59
    %104 = vadd.xlane.f32.xlu0 %v103
    %v105 = vpop.xlane.xlu0 %104
    %v106 = vadd.f32 %v60, %v61
    %107 = vadd.xlane.f32.xlu0 %v106
    %v108 = vpop.xlane.xlu0 %107
    %v109 = vadd.f32 %v62, %v63
    %110 = vadd.xlane.f32.xlu0 %v109
    %v111 = vpop.xlane.xlu0 %110
    %s112 = smul.u32 0, 2
    %s113 = scalar_lea.vmem %s1, %s112
    %v114 = vld [vmem:[%s113] sm:$0x3]
    %116 = vset.pattern.permute.xlu0 0
    %117 = vperm.xlu0 %116, %v114
    %v118 = vpop.permute.xlu0 %117
    %v119 = vlaneseq
    %v120 = vshrl.u32 %v119, 7
    %v121 = vsub.s32 0, %v120
    %v122 = vrot.slane %v118, %v121
    %v123 = vlaneseq
    %v124 = vshrl.u32 %v123, 7
    %v125 = vsub.s32 1, %v124
    %v126 = vrot.slane %v118, %v125
    %v129 = vmul.f32 %v66, %v122
    %v130 = vmul.f32 %v69, %v122
    %v131 = vmul.f32 %v72, %v122
    %v132 = vmul.f32 %v75, %v122
    %v133 = vmul.f32 %v78, %v122
    %v134 = vmul.f32 %v81, %v122
    %v135 = vmul.f32 %v84, %v122
    %v136 = vmul.f32 %v87, %v122
    %v137 = vmul.f32 %v90, %v126
    %v138 = vmul.f32 %v93, %v126
    %v139 = vmul.f32 %v96, %v126
    %v140 = vmul.f32 %v99, %v126
    %v141 = vmul.f32 %v102, %v126
    %v142 = vmul.f32 %v105, %v126
    %v143 = vmul.f32 %v108, %v126
    %v144 = vmul.f32 %v111, %v126
    %v145 = vld [vmem:[%s2] sm:$0xff]
    %v146 = vld [vmem:[%s2 + $0x8] sm:$0xff]
    %v147 = vld [vmem:[%s2 + $0x10] sm:$0xff]
    %v148 = vld [vmem:[%s2 + $0x18] sm:$0xff]
    %v149 = vld [vmem:[%s2 + $0x20] sm:$0xff]
    %v150 = vld [vmem:[%s2 + $0x28] sm:$0xff]
    %v151 = vld [vmem:[%s2 + $0x30] sm:$0xff]
    %v152 = vld [vmem:[%s2 + $0x38] sm:$0xff]
    %169 = vset.pattern.permute.xlu0 0
    %170 = vperm.xlu0 %169, %v129
    %v171 = vpop.permute.xlu0 %170
    %172 = vset.pattern.permute.xlu0 0
    %173 = vperm.xlu0 %172, %v130
    %v174 = vpop.permute.xlu0 %173
    %175 = vset.pattern.permute.xlu0 0
    %176 = vperm.xlu0 %175, %v131
    %v177 = vpop.permute.xlu0 %176
    %178 = vset.pattern.permute.xlu0 0
    %179 = vperm.xlu0 %178, %v132
    %v180 = vpop.permute.xlu0 %179
    %181 = vset.pattern.permute.xlu0 0
    %182 = vperm.xlu0 %181, %v133
    %v183 = vpop.permute.xlu0 %182
    %184 = vset.pattern.permute.xlu0 0
    %185 = vperm.xlu0 %184, %v134
    %v186 = vpop.permute.xlu0 %185
    %187 = vset.pattern.permute.xlu0 0
    %188 = vperm.xlu0 %187, %v135
    %v189 = vpop.permute.xlu0 %188
    %190 = vset.pattern.permute.xlu0 0
    %191 = vperm.xlu0 %190, %v136
    %v192 = vpop.permute.xlu0 %191
    %193 = vset.pattern.permute.xlu0 0
    %194 = vperm.xlu0 %193, %v137
    %v195 = vpop.permute.xlu0 %194
    %196 = vset.pattern.permute.xlu0 0
    %197 = vperm.xlu0 %196, %v138
    %v198 = vpop.permute.xlu0 %197
    %199 = vset.pattern.permute.xlu0 0
    %200 = vperm.xlu0 %199, %v139
    %v201 = vpop.permute.xlu0 %200
    %202 = vset.pattern.permute.xlu0 0
    %203 = vperm.xlu0 %202, %v140
    %v204 = vpop.permute.xlu0 %203
    %205 = vset.pattern.permute.xlu0 0
    %206 = vperm.xlu0 %205, %v141
    %v207 = vpop.permute.xlu0 %206
    %208 = vset.pattern.permute.xlu0 0
    %209 = vperm.xlu0 %208, %v142
    %v210 = vpop.permute.xlu0 %209
    %211 = vset.pattern.permute.xlu0 0
    %212 = vperm.xlu0 %211, %v143
    %v213 = vpop.permute.xlu0 %212
    %214 = vset.pattern.permute.xlu0 0
    %215 = vperm.xlu0 %214, %v144
    %v216 = vpop.permute.xlu0 %215
    %v217 = vlaneseq
    %v218 = vand.u32 %v217, 127
    %v219 = vlaneseq
    %v220 = vshrl.u32 %v219, 7
    %v221 = vsub.s32 %v218, %v220
    %v222 = vrot.slane %v171, %v221
    %v223 = vadd.s32 %v218, 4294967288
    %v224 = vlaneseq
    %v225 = vshrl.u32 %v224, 7
    %v226 = vsub.s32 %v223, %v225
    %v227 = vrot.slane %v174, %v226
    %vm228 = vcmask 130112
    %v229 = vsel %vm228, %v227, %v222
    %v230 = vadd.s32 %v218, 4294967280
    %v231 = vlaneseq
    %v232 = vshrl.u32 %v231, 7
    %v233 = vsub.s32 %v230, %v232
    %v234 = vrot.slane %v177, %v233
    %vm235 = vcmask 195712
    %v236 = vsel %vm235, %v234, %v229
    %v237 = vadd.s32 %v218, 4294967272
    %v238 = vlaneseq
    %v239 = vshrl.u32 %v238, 7
    %v240 = vsub.s32 %v237, %v239
    %v241 = vrot.slane %v180, %v240
    %vm242 = vcmask 261312
    %v243 = vsel %vm242, %v241, %v236
    %v244 = vadd.s32 %v218, 4294967264
    %v245 = vlaneseq
    %v246 = vshrl.u32 %v245, 7
    %v247 = vsub.s32 %v244, %v246
    %v248 = vrot.slane %v183, %v247
    %vm249 = vcmask 326912
    %v250 = vsel %vm249, %v248, %v243
    %v251 = vadd.s32 %v218, 4294967256
    %v252 = vlaneseq
    %v253 = vshrl.u32 %v252, 7
    %v254 = vsub.s32 %v251, %v253
    %v255 = vrot.slane %v186, %v254
    %vm256 = vcmask 392512
    %v257 = vsel %vm256, %v255, %v250
    %v258 = vadd.s32 %v218, 4294967248
    %v259 = vlaneseq
    %v260 = vshrl.u32 %v259, 7
    %v261 = vsub.s32 %v258, %v260
    %v262 = vrot.slane %v189, %v261
    %vm263 = vcmask 458112
    %v264 = vsel %vm263, %v262, %v257
    %v265 = vadd.s32 %v218, 4294967240
    %v266 = vlaneseq
    %v267 = vshrl.u32 %v266, 7
    %v268 = vsub.s32 %v265, %v267
    %v269 = vrot.slane %v192, %v268
    %vm270 = vcmask 523712
    %v271 = vsel %vm270, %v269, %v264
    %v272 = vlaneseq
    %v273 = vshrl.u32 %v272, 7
    %v274 = vsub.s32 %v218, %v273
    %v275 = vrot.slane %v195, %v274
    %v276 = vlaneseq
    %v277 = vshrl.u32 %v276, 7
    %v278 = vsub.s32 %v223, %v277
    %v279 = vrot.slane %v198, %v278
    %v280 = vsel %vm228, %v279, %v275
    %v281 = vlaneseq
    %v282 = vshrl.u32 %v281, 7
    %v283 = vsub.s32 %v230, %v282
    %v284 = vrot.slane %v201, %v283
    %v285 = vsel %vm235, %v284, %v280
    %v286 = vlaneseq
    %v287 = vshrl.u32 %v286, 7
    %v288 = vsub.s32 %v237, %v287
    %v289 = vrot.slane %v204, %v288
    %v290 = vsel %vm242, %v289, %v285
    %v291 = vlaneseq
    %v292 = vshrl.u32 %v291, 7
    %v293 = vsub.s32 %v244, %v292
    %v294 = vrot.slane %v207, %v293
    %v295 = vsel %vm249, %v294, %v290
    %v296 = vlaneseq
    %v297 = vshrl.u32 %v296, 7
    %v298 = vsub.s32 %v251, %v297
    %v299 = vrot.slane %v210, %v298
    %v300 = vsel %vm256, %v299, %v295
    %v301 = vlaneseq
    %v302 = vshrl.u32 %v301, 7
    %v303 = vsub.s32 %v258, %v302
    %v304 = vrot.slane %v213, %v303
    %v305 = vsel %vm263, %v304, %v300
    %v306 = vlaneseq
    %v307 = vshrl.u32 %v306, 7
    %v308 = vsub.s32 %v265, %v307
    %v309 = vrot.slane %v216, %v308
    %v310 = vsel %vm270, %v309, %v305
    %vm311 = vcmask 1041409
    %v312 = vsel %vm311, %v310, %v271
    %vm313 = vcmask 523264
    %v314 = vsel %vm313, %v312, 0
    %316 = vmatprep.subr.mxu0 0.0
    %317 = vmatpush1.msra.mxu0 %v145
    %318 = vmatprep.subr.mxu0 0.0
    %319 = vmatpush1.msra.mxu0 %v146
    %320 = vmatprep.subr.mxu0 0.0
    %321 = vmatpush1.msra.mxu0 %v147
    %322 = vmatprep.subr.mxu0 0.0
    %323 = vmatpush1.msra.mxu0 %v148
    %324 = vmatprep.subr.mxu0 0.0
    %325 = vmatpush1.msra.mxu0 %v149
    %326 = vmatprep.subr.mxu0 0.0
    %327 = vmatpush1.msra.mxu0 %v150
    %328 = vmatprep.subr.mxu0 0.0
    %329 = vmatpush1.msra.mxu0 %v151
    %330 = vmatprep.subr.mxu0 0.0
    %331 = vmatpush1.msra.mxu0 %v152
    %332 = vmatprep.subr.mxu0 0.0
    %333 = vmatpush1.msra.mxu0 0.0
    %334 = vmatprep.subr.mxu0 0.0
    %335 = vmatpush1.msra.mxu0 0.0
    %336 = vmatprep.subr.mxu0 0.0
    %337 = vmatpush1.msra.mxu0 0.0
    %338 = vmatprep.subr.mxu0 0.0
    %339 = vmatpush1.msra.mxu0 0.0
    %340 = vmatprep.subr.mxu0 0.0
    %341 = vmatpush1.msra.mxu0 0.0
    %342 = vmatprep.subr.mxu0 0.0
    %343 = vmatpush1.msra.mxu0 0.0
    %344 = vmatprep.subr.mxu0 0.0
    %345 = vmatpush1.msra.mxu0 0.0
    %346 = vmatprep.subr.mxu0 0.0
    %347 = vmatpush1.msra.mxu0 0.0
    %348 = vmatprep.subr.mxu0 0.0
    %349 = vmatpush1.msra.mxu0 0.0
    %350 = vmatprep.subr.mxu0 0.0
    %351 = vmatpush1.msra.mxu0 0.0
    %352 = vmatprep.subr.mxu0 0.0
    %353 = vmatpush1.msra.mxu0 0.0
    %354 = vmatprep.subr.mxu0 0.0
    %355 = vmatpush1.msra.mxu0 0.0
    %356 = vmatprep.subr.mxu0 0.0
    %357 = vmatpush1.msra.mxu0 0.0
    %358 = vmatprep.subr.mxu0 0.0
    %359 = vmatpush1.msra.mxu0 0.0
    %360 = vmatprep.subr.mxu0 0.0
    %361 = vmatpush1.msra.mxu0 0.0
    %362 = vmatprep.subr.mxu0 0.0
    %363 = vmatpush1.msra.mxu0 0.0
    %364 = vmatprep.subr.mxu0 0.0
    %365 = vmatpush1.msra.mxu0 0.0
    %366 = vmatprep.subr.mxu0 0.0
    %367 = vmatpush1.msra.mxu0 0.0
    %368 = vmatprep.subr.mxu0 0.0
    %369 = vmatpush1.msra.mxu0 0.0
    %370 = vmatprep.subr.mxu0 0.0
    %371 = vmatpush1.msra.mxu0 0.0
    %372 = vmatprep.subr.mxu0 0.0
    %373 = vmatpush1.msra.mxu0 0.0
    %374 = vmatprep.subr.mxu0 0.0
    %375 = vmatpush1.msra.mxu0 0.0
    %376 = vmatprep.subr.mxu0 0.0
    %377 = vmatpush1.msra.mxu0 0.0
    %378 = vmatprep.subr.mxu0 0.0
    %379 = vmatpush1.msra.mxu0 0.0
    %380 = vmatprep.mubr.f32.mxu0 0.0
    %381 = vmatmul.mubr.f32.gmra.mrb[0].mxu0 %v314
    %v382 = vpop.f32.mrb[0].mxu0
    %v383 = vadd.f32 0.0, %v382
    %v384 = vpop.f32.mrb[0].mxu0
    %385 = vdwg.mxu0
    %v386 = vmax.f32 %v383, 0.0
    %v387 = vld [vmem:[%s3] sm:$0xf]
    %vm388 = vcmask 31744
    %v390 = vsel %vm388, %v386, 0
    %vm392 = vcmask 1043456
    %v394 = vsel %vm392, %v387, 0
    %396 = vmatprep.subr.mxu0 0.0
    %397 = vmatpush1.msra.mxu0 %v394
    %398 = vmatprep.subr.mxu0 0.0
    %399 = vmatpush1.msra.mxu0 0.0
    %400 = vmatprep.subr.mxu0 0.0
    %401 = vmatpush1.msra.mxu0 0.0
    %402 = vmatprep.subr.mxu0 0.0
    %403 = vmatpush1.msra.mxu0 0.0
    %404 = vmatprep.subr.mxu0 0.0
    %405 = vmatpush1.msra.mxu0 0.0
    %406 = vmatprep.subr.mxu0 0.0
    %407 = vmatpush1.msra.mxu0 0.0
    %408 = vmatprep.subr.mxu0 0.0
    %409 = vmatpush1.msra.mxu0 0.0
    %410 = vmatprep.subr.mxu0 0.0
    %411 = vmatpush1.msra.mxu0 0.0
    %412 = vmatprep.subr.mxu0 0.0
    %413 = vmatpush1.msra.mxu0 0.0
    %414 = vmatprep.subr.mxu0 0.0
    %415 = vmatpush1.msra.mxu0 0.0
    %416 = vmatprep.subr.mxu0 0.0
    %417 = vmatpush1.msra.mxu0 0.0
    %418 = vmatprep.subr.mxu0 0.0
    %419 = vmatpush1.msra.mxu0 0.0
    %420 = vmatprep.subr.mxu0 0.0
    %421 = vmatpush1.msra.mxu0 0.0
    %422 = vmatprep.subr.mxu0 0.0
    %423 = vmatpush1.msra.mxu0 0.0
    %424 = vmatprep.subr.mxu0 0.0
    %425 = vmatpush1.msra.mxu0 0.0
    %426 = vmatprep.subr.mxu0 0.0
    %427 = vmatpush1.msra.mxu0 0.0
    %428 = vmatprep.subr.mxu0 0.0
    %429 = vmatpush1.msra.mxu0 0.0
    %430 = vmatprep.subr.mxu0 0.0
    %431 = vmatpush1.msra.mxu0 0.0
    %432 = vmatprep.subr.mxu0 0.0
    %433 = vmatpush1.msra.mxu0 0.0
    %434 = vmatprep.subr.mxu0 0.0
    %435 = vmatpush1.msra.mxu0 0.0
    %436 = vmatprep.subr.mxu0 0.0
    %437 = vmatpush1.msra.mxu0 0.0
    %438 = vmatprep.subr.mxu0 0.0
    %439 = vmatpush1.msra.mxu0 0.0
    %440 = vmatprep.subr.mxu0 0.0
    %441 = vmatpush1.msra.mxu0 0.0
    %442 = vmatprep.subr.mxu0 0.0
    %443 = vmatpush1.msra.mxu0 0.0
    %444 = vmatprep.subr.mxu0 0.0
    %445 = vmatpush1.msra.mxu0 0.0
    %446 = vmatprep.subr.mxu0 0.0
    %447 = vmatpush1.msra.mxu0 0.0
    %448 = vmatprep.subr.mxu0 0.0
    %449 = vmatpush1.msra.mxu0 0.0
    %450 = vmatprep.subr.mxu0 0.0
    %451 = vmatpush1.msra.mxu0 0.0
    %452 = vmatprep.subr.mxu0 0.0
    %453 = vmatpush1.msra.mxu0 0.0
    %454 = vmatprep.subr.mxu0 0.0
    %455 = vmatpush1.msra.mxu0 0.0
    %456 = vmatprep.subr.mxu0 0.0
    %457 = vmatpush1.msra.mxu0 0.0
    %458 = vmatprep.subr.mxu0 0.0
    %459 = vmatpush1.msra.mxu0 0.0
    %460 = vmatprep.mubr.f32.mxu0 0.0
    %461 = vmatmul.mubr.f32.gmra.mrb[0].mxu0 %v390
    %v462 = vpop.f32.mrb[0].mxu0
    %v463 = vadd.f32 0.0, %v462
    %v464 = vpop.f32.mrb[0].mxu0
    %465 = vdwg.mxu0
    %v466 = vxor.u32 %v463, 2147483648
    %v467 = vmul.f32 %v466, 1.442695
    %v468 = vpow.pop %v467
    %v469 = vadd.f32 %v468, 1.0
    %v470 = vrcp.pop %v469
    %v471 = vmul.f32 1.0, %v470
    %v472 = vlaneseq
    %v473 = vshrl.u32 %v472, 7
    %v474 = vsub.s32 0, %v473
    %v475 = vrot.slane %v471, %v474
    %477 = vbcast.lane.b32.xlu0 %v475, 256
    %v478 = vpop.permute.xlu0 %477
    %s480 = sor.u32 256, 8
    %481 = vbcast.lane.b32.xlu0 %v475, %s480
    %v482 = vpop.permute.xlu0 %481
    %s484 = sor.u32 256, 16
    %485 = vbcast.lane.b32.xlu0 %v475, %s484
    %v486 = vpop.permute.xlu0 %485
    %s488 = sor.u32 256, 24
    %489 = vbcast.lane.b32.xlu0 %v475, %s488
    %v490 = vpop.permute.xlu0 %489
    %s492 = sor.u32 256, 32
    %493 = vbcast.lane.b32.xlu0 %v475, %s492
    %v494 = vpop.permute.xlu0 %493
    %s496 = sor.u32 256, 40
    %497 = vbcast.lane.b32.xlu0 %v475, %s496
    %v498 = vpop.permute.xlu0 %497
    %s500 = sor.u32 256, 48
    %501 = vbcast.lane.b32.xlu0 %v475, %s500
    %v502 = vpop.permute.xlu0 %501
    %s504 = sor.u32 256, 56
    %505 = vbcast.lane.b32.xlu0 %v475, %s504
    %v506 = vpop.permute.xlu0 %505
    %v507 = vlaneseq
    %v508 = vshrl.u32 %v507, 7
    %v509 = vsub.s32 1, %v508
    %v510 = vrot.slane %v471, %v509
    %512 = vbcast.lane.b32.xlu0 %v510, 256
    %v513 = vpop.permute.xlu0 %512
    %s515 = sor.u32 256, 8
    %516 = vbcast.lane.b32.xlu0 %v510, %s515
    %v517 = vpop.permute.xlu0 %516
    %s519 = sor.u32 256, 16
    %520 = vbcast.lane.b32.xlu0 %v510, %s519
    %v521 = vpop.permute.xlu0 %520
    %s523 = sor.u32 256, 24
    %524 = vbcast.lane.b32.xlu0 %v510, %s523
    %v525 = vpop.permute.xlu0 %524
    %s527 = sor.u32 256, 32
    %528 = vbcast.lane.b32.xlu0 %v510, %s527
    %v529 = vpop.permute.xlu0 %528
    %s531 = sor.u32 256, 40
    %532 = vbcast.lane.b32.xlu0 %v510, %s531
    %v533 = vpop.permute.xlu0 %532
    %s535 = sor.u32 256, 48
    %536 = vbcast.lane.b32.xlu0 %v510, %s535
    %v537 = vpop.permute.xlu0 %536
    %s539 = sor.u32 256, 56
    %540 = vbcast.lane.b32.xlu0 %v510, %s539
    %v541 = vpop.permute.xlu0 %540
    %v542 = vmul.f32 %v32, %v478
    %v543 = vmul.f32 %v33, %v478
    %v544 = vmul.f32 %v34, %v482
    %v545 = vmul.f32 %v35, %v482
    %v546 = vmul.f32 %v36, %v486
    %v547 = vmul.f32 %v37, %v486
    %v548 = vmul.f32 %v38, %v490
    %v549 = vmul.f32 %v39, %v490
    %v550 = vmul.f32 %v40, %v494
    %v551 = vmul.f32 %v41, %v494
    %v552 = vmul.f32 %v42, %v498
    %v553 = vmul.f32 %v43, %v498
    %v554 = vmul.f32 %v44, %v502
    %v555 = vmul.f32 %v45, %v502
    %v556 = vmul.f32 %v46, %v506
    %v557 = vmul.f32 %v47, %v506
    %v558 = vmul.f32 %v48, %v513
    %v559 = vmul.f32 %v49, %v513
    %v560 = vmul.f32 %v50, %v517
    %v561 = vmul.f32 %v51, %v517
    %v562 = vmul.f32 %v52, %v521
    %v563 = vmul.f32 %v53, %v521
    %v564 = vmul.f32 %v54, %v525
    %v565 = vmul.f32 %v55, %v525
    %v566 = vmul.f32 %v56, %v529
    %v567 = vmul.f32 %v57, %v529
    %v568 = vmul.f32 %v58, %v533
    %v569 = vmul.f32 %v59, %v533
    %v570 = vmul.f32 %v60, %v537
    %v571 = vmul.f32 %v61, %v537
    %v572 = vmul.f32 %v62, %v541
    %v573 = vmul.f32 %v63, %v541
    %574 = vst [vmem:[#allocation5] sm:$0xff] %v542
    %575 = vst [vmem:[#allocation5 + $0x8] sm:$0xff] %v543
    %576 = vst [vmem:[#allocation5 + $0x10] sm:$0xff] %v544
    %577 = vst [vmem:[#allocation5 + $0x18] sm:$0xff] %v545
    %578 = vst [vmem:[#allocation5 + $0x20] sm:$0xff] %v546
    %579 = vst [vmem:[#allocation5 + $0x28] sm:$0xff] %v547
    %580 = vst [vmem:[#allocation5 + $0x30] sm:$0xff] %v548
    %581 = vst [vmem:[#allocation5 + $0x38] sm:$0xff] %v549
    %582 = vst [vmem:[#allocation5 + $0x40] sm:$0xff] %v550
    %583 = vst [vmem:[#allocation5 + $0x48] sm:$0xff] %v551
    %584 = vst [vmem:[#allocation5 + $0x50] sm:$0xff] %v552
    %585 = vst [vmem:[#allocation5 + $0x58] sm:$0xff] %v553
    %586 = vst [vmem:[#allocation5 + $0x60] sm:$0xff] %v554
    %587 = vst [vmem:[#allocation5 + $0x68] sm:$0xff] %v555
    %588 = vst [vmem:[#allocation5 + $0x70] sm:$0xff] %v556
    %589 = vst [vmem:[#allocation5 + $0x78] sm:$0xff] %v557
    %590 = vst [vmem:[#allocation5 + $0x80] sm:$0xff] %v558
    %591 = vst [vmem:[#allocation5 + $0x88] sm:$0xff] %v559
    %592 = vst [vmem:[#allocation5 + $0x90] sm:$0xff] %v560
    %593 = vst [vmem:[#allocation5 + $0x98] sm:$0xff] %v561
    %594 = vst [vmem:[#allocation5 + $0xa0] sm:$0xff] %v562
    %595 = vst [vmem:[#allocation5 + $0xa8] sm:$0xff] %v563
    %596 = vst [vmem:[#allocation5 + $0xb0] sm:$0xff] %v564
    %597 = vst [vmem:[#allocation5 + $0xb8] sm:$0xff] %v565
    %598 = vst [vmem:[#allocation5 + $0xc0] sm:$0xff] %v566
    %599 = vst [vmem:[#allocation5 + $0xc8] sm:$0xff] %v567
    %600 = vst [vmem:[#allocation5 + $0xd0] sm:$0xff] %v568
    %601 = vst [vmem:[#allocation5 + $0xd8] sm:$0xff] %v569
    %602 = vst [vmem:[#allocation5 + $0xe0] sm:$0xff] %v570
    %603 = vst [vmem:[#allocation5 + $0xe8] sm:$0xff] %v571
    %604 = vst [vmem:[#allocation5 + $0xf0] sm:$0xff] %v572
    %605 = vst [vmem:[#allocation5 + $0xf8] sm:$0xff] %v573
    // Predicated region
    $region22: #{tpu_custom_call.1} parent=1 // pred_check
      _
    $region23: #{tpu_custom_call.1} parent=1 // pred_check_branch
      %607 = sbr.rel (0) target = $region25
    $region24: #{tpu_custom_call.1} parent=1 // pred_region
      %s609 = ssub.s32 4096, 4096
      %610 = vsyncadd [#allocation4], %s609
      %s611 = sshll.u32 [#allocation5], 4
      %s612 = int_to_ptr.vmem [resolvable:$true] %s611
      %617 = dma.vmem_to_hbm [thread:$0]  %s612, 4096, %s4, [#allocation4], 256, 256, 16
    $region25: #{tpu_custom_call.1} parent=1 // pred_fallthru
      _
    // Predicated region
    $region26: #{tpu_custom_call.1} parent=1 // pred_check
      _
    $region27: #{tpu_custom_call.1} parent=1 // pred_check_branch
      %619 = sbr.rel (0) target = $region29
    $region28: #{tpu_custom_call.1} parent=1 // pred_region
      %620 = dma.done [#allocation4], 4096
    $region29: #{tpu_custom_call.1} parent=1 // pred_fallthru
      _
    %621 = vsyncpa [#allocation3], 1
    %622 = vsyncpa [#allocation4], 1

</llo_original>
